<compile_context>
chip_gen: v7x
topology: tpu7x:2x2x1
jax: 0.10.0
libtpu: 0.0.40
codegen_flags: <defaults>
</compile_context>

<pallas_src>
import numpy as np
import jax
import jax.numpy as jnp
from jax import lax
from jax.experimental import pallas as pl
from jax.experimental.pallas import tpu as pltpu

LN_EPS = 1e-5
NEG_BIG = -1e30   # finite, bf16-representable pad-mask value


def _round_up(x, m):
    return (x + m - 1) // m * m


def _entity_encoder_kernel(head_ref, weak_ref, rel_ref, ent_ref, mask_ref,
                           wbilm_ref, ssum_ref, sexp_ref, wtail_ref, whead_ref,
                           gamma_ref, beta_ref, out_ref):
    head = head_ref[...].astype(jnp.float32)        # [TB, D]
    weak = weak_ref[...].astype(jnp.float32)        # [TB, D]
    rel = rel_ref[...].astype(jnp.float32)          # [TB, M*D]  (flat, lane-dense)
    ent = ent_ref[...].astype(jnp.float32)          # [TB, M*D]
    mask_add = mask_ref[...].astype(jnp.float32)    # [TB, M]    (0 valid, -1e30 pad)

    # Bilinear projection tiled over neighbors in one MXU push:
    #   vM[n, m*D+d] = (weak @ W_bil)[n, d]
    vM = jnp.dot(weak, wbilm_ref[...], preferred_element_type=jnp.float32)   # [TB, M*D]

    # score[n, m] = sum_d vM[n, m*D+d] * rel[n, m*D+d]
    # segmented lane-reduce done on the MXU (no reshape / XLU relayout).
    score = jnp.dot(vM * rel, ssum_ref[...],
                    preferred_element_type=jnp.float32) + mask_add           # [TB, M]

    m = jnp.max(score, axis=-1, keepdims=True)
    e = jnp.exp(score - m)
    denom = jnp.sum(e, axis=-1, keepdims=True)
    att = e * pl.reciprocal(denom, approx=True)                              # softmax over M

    # attM[n, m*D+d] = att[n, m]   (MXU broadcast via segment-expand matrix).
    attM = jnp.dot(att, sexp_ref[...], preferred_element_type=jnp.float32)   # [TB, M*D]

    # Linear_tail(pooled) with the pooling fold: (attM * ent) @ tile(W_tail.T).
    # Linear_head(head) as a second dot; sum instead of a [TB, 2D] concatenate.
    h = (jnp.dot(attM * ent, wtail_ref[...], preferred_element_type=jnp.float32)
         + jnp.dot(head, whead_ref[...], preferred_element_type=jnp.float32))  # [TB, D]
    h = jnp.maximum(h, 0.0)

    # LayerNorm(h + head) in f32.
    x = h + head
    mu = jnp.mean(x, axis=-1, keepdims=True)
    var = jnp.mean((x - mu) * (x - mu), axis=-1, keepdims=True)
    y = (x - mu) * lax.rsqrt(var + LN_EPS)
    out_ref[...] = y * gamma_ref[...] + beta_ref[...]


def entity_encoder_forward(params, entity, left_conn, right_conn, pad_idx,
                           *, tb_cap=1024):
    """Pallas-backed EntityEncoder.forward (entity_meta path, task_emb=None, eval)."""
    emb = params["symbol_emb"]                             # [num_symbols+1, D]
    D = emb.shape[1]
    B = entity.shape[0]
    M = left_conn.shape[1]
    MD = M * D

    # --- glue (plain JAX): embedding gathers, mask/weight prep, L/R stacking ---
    ent_emb = emb[entity]                                  # [B, 2, D]
    head_l, head_r = ent_emb[:, 0, :], ent_emb[:, 1, :]
    weak = head_r - head_l                                 # task_emb=None branch

    rel_ids_l, ent_ids_l = left_conn[:, :, 0], left_conn[:, :, 1]
    rel_ids_r, ent_ids_r = right_conn[:, :, 0], right_conn[:, :, 1]

    N = 2 * B
    head2 = jnp.concatenate([head_l, head_r], axis=0).astype(jnp.bfloat16)    # [2B, D]
    weak2 = jnp.concatenate([weak, weak], axis=0).astype(jnp.bfloat16)        # [2B, D]
    rel2 = jnp.concatenate([emb[rel_ids_l], emb[rel_ids_r]],
                           axis=0).astype(jnp.bfloat16).reshape(N, MD)        # [2B, M*D]
    ent2 = jnp.concatenate([emb[ent_ids_l], emb[ent_ids_r]],
                           axis=0).astype(jnp.bfloat16).reshape(N, MD)        # [2B, M*D]
    pad2 = jnp.concatenate([rel_ids_l == pad_idx, rel_ids_r == pad_idx], axis=0)
    mask_add2 = jnp.where(pad2, NEG_BIG, 0.0).astype(jnp.bfloat16)            # [2B, M]

    # Resident weights (f32, tiny) — neighbor-tiled / segment matrices precomputed once.
    wbil = params["w_bilinear"].astype(jnp.float32)                           # [D, D]
    wbilm = jnp.tile(wbil, (1, M))                                            # [D, M*D]
    # nn.Linear does y = x @ W.T; tail projection pre-folded with the pooling sum.
    wtail_exp = jnp.tile(params["w_tail"].T.astype(jnp.float32), (M, 1))      # [M*D, D]
    whead_t = params["w_head"].T.astype(jnp.float32)                          # [D, D]
    seg = (np.arange(MD)[:, None] // D) == np.arange(M)[None, :]
    ssum = jnp.asarray(seg, dtype=jnp.float32)                                # [M*D, M]
    sexp = ssum.T                                                             # [M, M*D]
    gamma = params["ln_gamma"].reshape(1, D).astype(jnp.float32)
    beta = params["ln_beta"].reshape(1, D).astype(jnp.float32)

    # --- batch tiling: TB rows per grid step (multiple of 8 sublanes), grid >= 2 ---
    N8 = _round_up(N, 8)
    if N8 <= 8:
        TB = N8
    else:
        # Cap so there are always >= 2 grid steps (v7x megacore has work to split);
        # tb_cap=1024 keeps the flattened double-buffered footprint ~5 MiB, well
        # inside every generation's default scoped-VMEM limit.
        TB = min(tb_cap, _round_up((N8 + 1) // 2, 8))
    Npad = _round_up(N, TB)
    if Npad != N:
        pad = Npad - N
        head2 = jnp.pad(head2, ((0, pad), (0, 0)))
        weak2 = jnp.pad(weak2, ((0, pad), (0, 0)))
        rel2 = jnp.pad(rel2, ((0, pad), (0, 0)))
        ent2 = jnp.pad(ent2, ((0, pad), (0, 0)))
        mask_add2 = jnp.pad(mask_add2, ((0, pad), (0, 0)), constant_values=NEG_BIG)

    out2 = pl.pallas_call(
        _entity_encoder_kernel,
        out_shape=jax.ShapeDtypeStruct((Npad, D), jnp.float32),
        grid=(Npad // TB,),
        in_specs=[
            pl.BlockSpec((TB, D), lambda i: (i, 0)),          # heads (stacked L/R, bf16)
            pl.BlockSpec((TB, D), lambda i: (i, 0)),          # weak_rel (bf16)
            pl.BlockSpec((TB, MD), lambda i: (i, 0)),         # rel embeds, flat lane-dense
            pl.BlockSpec((TB, MD), lambda i: (i, 0)),         # ent embeds, flat lane-dense
            pl.BlockSpec((TB, M), lambda i: (i, 0)),          # additive pad mask (bf16)
            pl.BlockSpec((D, MD), lambda i: (0, 0)),          # W_bilinear tiled (resident)
            pl.BlockSpec((MD, M), lambda i: (0, 0)),          # segment-sum matrix
            pl.BlockSpec((M, MD), lambda i: (0, 0)),          # segment-expand matrix
            pl.BlockSpec((MD, D), lambda i: (0, 0)),          # tile(W_tail.T) (pool folded)
            pl.BlockSpec((D, D), lambda i: (0, 0)),           # W_head.T
            pl.BlockSpec((1, D), lambda i: (0, 0)),           # LN gamma
            pl.BlockSpec((1, D), lambda i: (0, 0)),           # LN beta
        ],
        out_specs=pl.BlockSpec((TB, D), lambda i: (i, 0)),
        compiler_params=pltpu.CompilerParams(
            dimension_semantics=("parallel",)),               # v7x: shard grid on 2 TCs
    )(head2, weak2, rel2, ent2, mask_add2,
      wbilm, ssum, sexp, wtail_exp, whead_t, gamma, beta)

    return out2[:B], out2[B:N]


def _reference_forward(params, entity, left_conn, right_conn, pad_idx):
    """Pure-numpy reference mirroring the PyTorch forward (eval mode)."""
    emb = np.asarray(params["symbol_emb"], dtype=np.float64)
    wbil = np.asarray(params["w_bilinear"], dtype=np.float64)
    wtail = np.asarray(params["w_tail"], dtype=np.float64)
    whead = np.asarray(params["w_head"], dtype=np.float64)
    gamma = np.asarray(params["ln_gamma"], dtype=np.float64)
    beta = np.asarray(params["ln_beta"], dtype=np.float64)
    entity = np.asarray(entity)
    left_conn = np.asarray(left_conn)
    right_conn = np.asarray(right_conn)

    ent_emb = emb[entity]
    head_l, head_r = ent_emb[:, 0, :], ent_emb[:, 1, :]
    weak_rel = head_r - head_l

    def side(conn, head):
        rel_ids, ent_ids = conn[:, :, 0], conn[:, :, 1]
        rel, ent = emb[rel_ids], emb[ent_ids]
        mask = rel_ids == pad_idx
        v = weak_rel @ wbil
        score = np.einsum("bd,bmd->bm", v, rel)
        score = np.where(mask, -np.inf, score)
        score = score - score.max(axis=1, keepdims=True)
        e = np.exp(score)
        att = e / e.sum(axis=1, keepdims=True)
        pooled = np.einsum("bm,bmd->bd", att, ent)
        h = np.maximum(pooled @ wtail.T + head @ whead.T, 0.0)
        x = h + head
        mu = x.mean(axis=-1, keepdims=True)
        var = ((x - mu) ** 2).mean(axis=-1, keepdims=True)
        return ((x - mu) / np.sqrt(var + LN_EPS)) * gamma + beta

    return side(left_conn, head_l), side(right_conn, head_r)


if __name__ == "__main__":
    num_symbols = 10          # vocab; pad_idx = num_symbols
    embed_dim = 32
    B = 4                     # batch of entity pairs
    M = 8                     # max neighbors per side
    pad_idx = num_symbols

    key = jax.random.PRNGKey(0)
    k_emb, k_bil, k_tail, k_head, k_g, k_ent, k_cl, k_cr = jax.random.split(key, 8)

    # Deterministic synthetic parameters (shapes follow the module __init__).
    symbol_emb = 0.5 * jax.random.normal(k_emb, (num_symbols + 1, embed_dim), jnp.float32)
    symbol_emb = symbol_emb.at[pad_idx].set(0.0)   # nn.Embedding padding_idx row
    scale = 1.0 / np.sqrt(embed_dim)
    params = {
        "symbol_emb": symbol_emb,
        "w_bilinear": scale * jax.random.normal(k_bil, (embed_dim, embed_dim), jnp.float32),
        "w_tail": scale * jax.random.normal(k_tail, (embed_dim, embed_dim), jnp.float32),
        "w_head": scale * jax.random.normal(k_head, (embed_dim, embed_dim), jnp.float32),
        "ln_gamma": 1.0 + 0.1 * jax.random.normal(k_g, (embed_dim,), jnp.float32),
        "ln_beta": jnp.zeros((embed_dim,), jnp.float32),
    }
    # gcn_w / gcn_b belong to neighbor_encoder_mean, which forward() never calls.

    # Inputs: entity id pairs + neighbor connections with trailing padding.
    entity = jax.random.randint(k_ent, (B, 2), 0, num_symbols, dtype=jnp.int32)

    def make_conn(k, valid_counts):
        # np.array(...) makes a WRITABLE copy (np.asarray on a jax array is read-only).
        conn = np.array(jax.random.randint(k, (B, M, 2), 0, num_symbols, dtype=jnp.int32))
        for b, nv in enumerate(valid_counts):
            conn[b, nv:, :] = pad_idx           # pad unused neighbor slots
        return jnp.asarray(conn)

    left_conn = make_conn(k_cl, [M, M - 2, 3, 1])
    right_conn = make_conn(k_cr, [2, M, 5, M - 1])

    out_left, out_right = entity_encoder_forward(params, entity, left_conn, right_conn, pad_idx)
    jax.block_until_ready((out_left, out_right))

    ref_left, ref_right = _reference_forward(params, entity, left_conn, right_conn, pad_idx)
    # bf16 head/rel/ent on the hot path -> slightly looser tolerance than pure-f32.
    np.testing.assert_allclose(np.asarray(out_left), ref_left, rtol=6e-2, atol=6e-2)
    np.testing.assert_allclose(np.asarray(out_right), ref_right, rtol=6e-2, atol=6e-2)

    print("KERNEL_OK")
</pallas_src>

<mosaic_0001>
module attributes {stable_mosaic.version = 11 : i64} {
  func.func @_entity_encoder_kernel(%arg0: i32, %arg1: memref<8x32xbf16, #tpu.memory_space<vmem>>, %arg2: memref<8x32xbf16, #tpu.memory_space<vmem>>, %arg3: memref<8x256xbf16, #tpu.memory_space<vmem>>, %arg4: memref<8x256xbf16, #tpu.memory_space<vmem>>, %arg5: memref<8x8xbf16, #tpu.memory_space<vmem>>, %arg6: memref<32x256xf32, #tpu.memory_space<vmem>>, %arg7: memref<256x8xf32, #tpu.memory_space<vmem>>, %arg8: memref<8x256xf32, #tpu.memory_space<vmem>>, %arg9: memref<256x32xf32, #tpu.memory_space<vmem>>, %arg10: memref<32x32xf32, #tpu.memory_space<vmem>>, %arg11: memref<1x32xf32, #tpu.memory_space<vmem>>, %arg12: memref<1x32xf32, #tpu.memory_space<vmem>>, %arg13: memref<8x32xf32, #tpu.memory_space<vmem>>) attributes {dimension_semantics = [#tpu.dimension_semantics<parallel>], iteration_bounds = array<i64: 1>, scalar_prefetch = 0 : i64, scratch_operands = 0 : i64, tpu.core_type = #tpu.core_type<tc>, window_params = [{transform_indices = @transform_0, window_bounds = array<i64: 8, 32>}, {transform_indices = @transform_1, window_bounds = array<i64: 8, 32>}, {transform_indices = @transform_2, window_bounds = array<i64: 8, 256>}, {transform_indices = @transform_3, window_bounds = array<i64: 8, 256>}, {transform_indices = @transform_4, window_bounds = array<i64: 8, 8>}, {pipeline_mode = #tpu.pipeline_mode<synchronous>, transform_indices = @transform_5, window_bounds = array<i64: 32, 256>}, {pipeline_mode = #tpu.pipeline_mode<synchronous>, transform_indices = @transform_6, window_bounds = array<i64: 256, 8>}, {pipeline_mode = #tpu.pipeline_mode<synchronous>, transform_indices = @transform_7, window_bounds = array<i64: 8, 256>}, {pipeline_mode = #tpu.pipeline_mode<synchronous>, transform_indices = @transform_8, window_bounds = array<i64: 256, 32>}, {pipeline_mode = #tpu.pipeline_mode<synchronous>, transform_indices = @transform_9, window_bounds = array<i64: 32, 32>}, {pipeline_mode = #tpu.pipeline_mode<synchronous>, transform_indices = @transform_10, window_bounds = array<i64: 1, 32>}, {pipeline_mode = #tpu.pipeline_mode<synchronous>, transform_indices = @transform_11, window_bounds = array<i64: 1, 32>}, {transform_indices = @transform_12, window_bounds = array<i64: 8, 32>}]} {
    %c0 = arith.constant 0 : index
    %c0_0 = arith.constant 0 : index
    %0 = vector.load %arg1[%c0, %c0_0] : memref<8x32xbf16, #tpu.memory_space<vmem>>, vector<8x32xbf16>
    %1 = arith.extf %0 : vector<8x32xbf16> to vector<8x32xf32>
    %c0_1 = arith.constant 0 : index
    %c0_2 = arith.constant 0 : index
    %2 = vector.load %arg2[%c0_1, %c0_2] : memref<8x32xbf16, #tpu.memory_space<vmem>>, vector<8x32xbf16>
    %3 = arith.extf %2 : vector<8x32xbf16> to vector<8x32xf32>
    %c0_3 = arith.constant 0 : index
    %c0_4 = arith.constant 0 : index
    %4 = vector.load %arg3[%c0_3, %c0_4] : memref<8x256xbf16, #tpu.memory_space<vmem>>, vector<8x256xbf16>
    %5 = arith.extf %4 : vector<8x256xbf16> to vector<8x256xf32>
    %c0_5 = arith.constant 0 : index
    %c0_6 = arith.constant 0 : index
    %6 = vector.load %arg4[%c0_5, %c0_6] : memref<8x256xbf16, #tpu.memory_space<vmem>>, vector<8x256xbf16>
    %7 = arith.extf %6 : vector<8x256xbf16> to vector<8x256xf32>
    %c0_7 = arith.constant 0 : index
    %c0_8 = arith.constant 0 : index
    %8 = vector.load %arg5[%c0_7, %c0_8] : memref<8x8xbf16, #tpu.memory_space<vmem>>, vector<8x8xbf16>
    %9 = arith.extf %8 : vector<8x8xbf16> to vector<8x8xf32>
    %c0_9 = arith.constant 0 : index
    %c0_10 = arith.constant 0 : index
    %10 = vector.load %arg6[%c0_9, %c0_10] : memref<32x256xf32, #tpu.memory_space<vmem>>, vector<32x256xf32>
    %cst = arith.constant dense<0.000000e+00> : vector<8x256xf32>
    %11 = tpu.matmul %3, %10, %cst {dimension_numbers = #tpu.dot_dimension_numbers<[1], [0], [0], [1], [0, 0, 1, 1], [], []>} : vector<8x32xf32>, vector<32x256xf32>, vector<8x256xf32> -> vector<8x256xf32>
    %12 = arith.mulf %11, %5 : vector<8x256xf32>
    %c0_11 = arith.constant 0 : index
    %c0_12 = arith.constant 0 : index
    %13 = vector.load %arg7[%c0_11, %c0_12] : memref<256x8xf32, #tpu.memory_space<vmem>>, vector<256x8xf32>
    %cst_13 = arith.constant dense<0.000000e+00> : vector<8x8xf32>
    %14 = tpu.matmul %12, %13, %cst_13 {dimension_numbers = #tpu.dot_dimension_numbers<[1], [0], [0], [1], [0, 0, 1, 1], [], []>} : vector<8x256xf32>, vector<256x8xf32>, vector<8x8xf32> -> vector<8x8xf32>
    %15 = arith.addf %14, %9 : vector<8x8xf32>
    %cst_14 = arith.constant dense<0xFF800000> : vector<8xf32>
    %16 = vector.multi_reduction <maximumf>, %15, %cst_14 [1] : vector<8x8xf32> to vector<8xf32>
    %17 = vector.shape_cast %16 : vector<8xf32> to vector<8x1xf32>
    %18 = vector.broadcast %17 : vector<8x1xf32> to vector<8x8xf32>
    %19 = arith.subf %15, %18 : vector<8x8xf32>
    %20 = math.exp %19 : vector<8x8xf32>
    %cst_15 = arith.constant dense<0.000000e+00> : vector<8xf32>
    %21 = vector.multi_reduction <add>, %20, %cst_15 [1] : vector<8x8xf32> to vector<8xf32>
    %22 = vector.shape_cast %21 : vector<8xf32> to vector<8x1xf32>
    %23 = tpu.reciprocal %22 {approx = true} : vector<8x1xf32> -> vector<8x1xf32>
    %24 = vector.broadcast %23 : vector<8x1xf32> to vector<8x8xf32>
    %25 = arith.mulf %20, %24 : vector<8x8xf32>
    %c0_16 = arith.constant 0 : index
    %c0_17 = arith.constant 0 : index
    %26 = vector.load %arg8[%c0_16, %c0_17] : memref<8x256xf32, #tpu.memory_space<vmem>>, vector<8x256xf32>
    %cst_18 = arith.constant dense<0.000000e+00> : vector<8x256xf32>
    %27 = tpu.matmul %25, %26, %cst_18 {dimension_numbers = #tpu.dot_dimension_numbers<[1], [0], [0], [1], [0, 0, 1, 1], [], []>} : vector<8x8xf32>, vector<8x256xf32>, vector<8x256xf32> -> vector<8x256xf32>
    %28 = arith.mulf %27, %7 : vector<8x256xf32>
    %c0_19 = arith.constant 0 : index
    %c0_20 = arith.constant 0 : index
    %29 = vector.load %arg9[%c0_19, %c0_20] : memref<256x32xf32, #tpu.memory_space<vmem>>, vector<256x32xf32>
    %cst_21 = arith.constant dense<0.000000e+00> : vector<8x32xf32>
    %30 = tpu.matmul %28, %29, %cst_21 {dimension_numbers = #tpu.dot_dimension_numbers<[1], [0], [0], [1], [0, 0, 1, 1], [], []>} : vector<8x256xf32>, vector<256x32xf32>, vector<8x32xf32> -> vector<8x32xf32>
    %c0_22 = arith.constant 0 : index
    %c0_23 = arith.constant 0 : index
    %31 = vector.load %arg10[%c0_22, %c0_23] : memref<32x32xf32, #tpu.memory_space<vmem>>, vector<32x32xf32>
    %cst_24 = arith.constant dense<0.000000e+00> : vector<8x32xf32>
    %32 = tpu.matmul %1, %31, %cst_24 {dimension_numbers = #tpu.dot_dimension_numbers<[1], [0], [0], [1], [0, 0, 1, 1], [], []>} : vector<8x32xf32>, vector<32x32xf32>, vector<8x32xf32> -> vector<8x32xf32>
    %33 = arith.addf %30, %32 : vector<8x32xf32>
    %cst_25 = arith.constant 0.000000e+00 : f32
    %34 = vector.broadcast %cst_25 : f32 to vector<8x32xf32>
    %35 = arith.maximumf %33, %34 : vector<8x32xf32>
    %36 = arith.addf %35, %1 : vector<8x32xf32>
    %cst_26 = arith.constant dense<0.000000e+00> : vector<8xf32>
    %37 = vector.multi_reduction <add>, %36, %cst_26 [1] : vector<8x32xf32> to vector<8xf32>
    %38 = vector.shape_cast %37 : vector<8xf32> to vector<8x1xf32>
    %cst_27 = arith.constant 3.200000e+01 : f32
    %39 = vector.broadcast %cst_27 : f32 to vector<8x1xf32>
    %40 = arith.divf %38, %39 : vector<8x1xf32>
    %41 = vector.broadcast %40 : vector<8x1xf32> to vector<8x32xf32>
    %42 = arith.subf %36, %41 : vector<8x32xf32>
    %43 = vector.broadcast %40 : vector<8x1xf32> to vector<8x32xf32>
    %44 = arith.subf %36, %43 : vector<8x32xf32>
    %45 = arith.mulf %42, %44 : vector<8x32xf32>
    %cst_28 = arith.constant dense<0.000000e+00> : vector<8xf32>
    %46 = vector.multi_reduction <add>, %45, %cst_28 [1] : vector<8x32xf32> to vector<8xf32>
    %47 = vector.shape_cast %46 : vector<8xf32> to vector<8x1xf32>
    %cst_29 = arith.constant 3.200000e+01 : f32
    %48 = vector.broadcast %cst_29 : f32 to vector<8x1xf32>
    %49 = arith.divf %47, %48 : vector<8x1xf32>
    %50 = vector.broadcast %40 : vector<8x1xf32> to vector<8x32xf32>
    %51 = arith.subf %36, %50 : vector<8x32xf32>
    %cst_30 = arith.constant 9.99999974E-6 : f32
    %52 = vector.broadcast %cst_30 : f32 to vector<8x1xf32>
    %53 = arith.addf %49, %52 : vector<8x1xf32>
    %54 = math.rsqrt %53 : vector<8x1xf32>
    %55 = vector.broadcast %54 : vector<8x1xf32> to vector<8x32xf32>
    %56 = arith.mulf %51, %55 : vector<8x32xf32>
    %c0_31 = arith.constant 0 : index
    %c0_32 = arith.constant 0 : index
    %57 = vector.load %arg11[%c0_31, %c0_32] : memref<1x32xf32, #tpu.memory_space<vmem>>, vector<1x32xf32>
    %58 = vector.broadcast %57 : vector<1x32xf32> to vector<8x32xf32>
    %59 = arith.mulf %56, %58 : vector<8x32xf32>
    %c0_33 = arith.constant 0 : index
    %c0_34 = arith.constant 0 : index
    %60 = vector.load %arg12[%c0_33, %c0_34] : memref<1x32xf32, #tpu.memory_space<vmem>>, vector<1x32xf32>
    %61 = vector.broadcast %60 : vector<1x32xf32> to vector<8x32xf32>
    %62 = arith.addf %59, %61 : vector<8x32xf32>
    %c0_35 = arith.constant 0 : index
    %c0_36 = arith.constant 0 : index
    %63 = vector.load %arg13[%c0_35, %c0_36] : memref<8x32xf32, #tpu.memory_space<vmem>>, vector<8x32xf32>
    tpu.vector_store %arg13[%c0_35, %c0_36], %62 {strides = array<i32>} : memref<8x32xf32, #tpu.memory_space<vmem>>, vector<8x32xf32>,
    return
  }
  func.func @transform_0(%arg0: i32) -> (i32, i32) {
    %c0_i32 = arith.constant 0 : i32
    %c0_i32_0 = arith.constant 0 : i32
    return %arg0, %c0_i32 : i32, i32
  }
  func.func @transform_1(%arg0: i32) -> (i32, i32) {
    %c0_i32 = arith.constant 0 : i32
    %c0_i32_0 = arith.constant 0 : i32
    return %arg0, %c0_i32 : i32, i32
  }
  func.func @transform_2(%arg0: i32) -> (i32, i32) {
    %c0_i32 = arith.constant 0 : i32
    %c0_i32_0 = arith.constant 0 : i32
    return %arg0, %c0_i32 : i32, i32
  }
  func.func @transform_3(%arg0: i32) -> (i32, i32) {
    %c0_i32 = arith.constant 0 : i32
    %c0_i32_0 = arith.constant 0 : i32
    return %arg0, %c0_i32 : i32, i32
  }
  func.func @transform_4(%arg0: i32) -> (i32, i32) {
    %c0_i32 = arith.constant 0 : i32
    %c0_i32_0 = arith.constant 0 : i32
    return %arg0, %c0_i32 : i32, i32
  }
  func.func @transform_5(%arg0: i32) -> (i32, i32) {
    %c0_i32 = arith.constant 0 : i32
    %c0_i32_0 = arith.constant 0 : i32
    %c0_i32_1 = arith.constant 0 : i32
    return %c0_i32, %c0_i32_0 : i32, i32
  }
  func.func @transform_6(%arg0: i32) -> (i32, i32) {
    %c0_i32 = arith.constant 0 : i32
    %c0_i32_0 = arith.constant 0 : i32
    %c0_i32_1 = arith.constant 0 : i32
    return %c0_i32, %c0_i32_0 : i32, i32
  }
  func.func @transform_7(%arg0: i32) -> (i32, i32) {
    %c0_i32 = arith.constant 0 : i32
    %c0_i32_0 = arith.constant 0 : i32
    %c0_i32_1 = arith.constant 0 : i32
    return %c0_i32, %c0_i32_0 : i32, i32
  }
  func.func @transform_8(%arg0: i32) -> (i32, i32) {
    %c0_i32 = arith.constant 0 : i32
    %c0_i32_0 = arith.constant 0 : i32
    %c0_i32_1 = arith.constant 0 : i32
    return %c0_i32, %c0_i32_0 : i32, i32
  }
  func.func @transform_9(%arg0: i32) -> (i32, i32) {
    %c0_i32 = arith.constant 0 : i32
    %c0_i32_0 = arith.constant 0 : i32
    %c0_i32_1 = arith.constant 0 : i32
    return %c0_i32, %c0_i32_0 : i32, i32
  }
  func.func @transform_10(%arg0: i32) -> (i32, i32) {
    %c0_i32 = arith.constant 0 : i32
    %c0_i32_0 = arith.constant 0 : i32
    %c0_i32_1 = arith.constant 0 : i32
    return %c0_i32, %c0_i32_0 : i32, i32
  }
  func.func @transform_11(%arg0: i32) -> (i32, i32) {
    %c0_i32 = arith.constant 0 : i32
    %c0_i32_0 = arith.constant 0 : i32
    %c0_i32_1 = arith.constant 0 : i32
    return %c0_i32, %c0_i32_0 : i32, i32
  }
  func.func @transform_12(%arg0: i32) -> (i32, i32) {
    %c0_i32 = arith.constant 0 : i32
    %c0_i32_0 = arith.constant 0 : i32
    return %arg0, %c0_i32 : i32, i32
  }
}

</mosaic_0001>

<llo_original>
// kernel: tpu_custom_call.1
$region0: #{tpu_custom_call.1}
  #allocation0 [shape = 'u32[]', space=smem, size = 0x4, offset = 0x4, fixed_abs, tag = 'smem constant byte address 0x4 - core index']
  #allocation1 [shape = 'u32[144,128]{1,0:T(1,128)}', space=vmem, size = 0x12000, scoped, tag = 'internal scratch']
  %s0 = inlined_call_operand.vmem [shape: bf16[8,32], index: 0, kind: input, shape index: {}]
  %s1 = inlined_call_operand.vmem [shape: bf16[8,32], index: 1, kind: input, shape index: {}]
  %s2 = inlined_call_operand.vmem [shape: bf16[8,256], index: 2, kind: input, shape index: {}]
  %s3 = inlined_call_operand.vmem [shape: bf16[8,256], index: 3, kind: input, shape index: {}]
  %s4 = inlined_call_operand.vmem [shape: bf16[8,8], index: 4, kind: input, shape index: {}]
  %s5 = inlined_call_operand.vmem [shape: f32[32,256], index: 5, kind: input, shape index: {}]
  %s6 = inlined_call_operand.vmem [shape: f32[256,8], index: 6, kind: input, shape index: {}]
  %s7 = inlined_call_operand.vmem [shape: f32[8,256], index: 7, kind: input, shape index: {}]
  %s8 = inlined_call_operand.vmem [shape: f32[256,32], index: 8, kind: input, shape index: {}]
  %s9 = inlined_call_operand.vmem [shape: f32[32,32], index: 9, kind: input, shape index: {}]
  %s10 = inlined_call_operand.vmem [shape: f32[1,32], index: 10, kind: input, shape index: {}]
  %s11 = inlined_call_operand.vmem [shape: f32[1,32], index: 11, kind: input, shape index: {}]
  %s12 = inlined_call_operand.hbm [shape: f32[8,32], index: 12, kind: output, shape index: {}]
  %s13 = sld [smem:[#allocation0]]
  $region58: #{tpu_custom_call.1} parent=0
    _
  %s15 = ssub.s32 1, %s13
  %s16 = scalar_select 0, %s15, %s13
  $region1: #{tpu_custom_call.1} parent=0
    #allocation2 [shape = 'u8[4096]{0}', space=vmem, size = 0x1000, scoped, tag = 'output window, operand 0, single buffered']
    #allocation3 [shape = 's32[1]{0}', space=sflag, size = 0x4, scoped, tag = 'scoped memory for tpu_custom_call.1']
    %17 = vsyncpa [#allocation3], 0
    // Predicated region
    $region2: #{tpu_custom_call.1} parent=1 // pred_check
      _
    $region3: #{tpu_custom_call.1} parent=1 // pred_check_branch
      %19 = sbr.rel (0) target = $region5
    $region4: #{tpu_custom_call.1} parent=1 // pred_region
      _
    $region5: #{tpu_custom_call.1} parent=1 // pred_fallthru
      _
    // Predicated region
    $region6: #{tpu_custom_call.1} parent=1 // pred_check
      _
    $region7: #{tpu_custom_call.1} parent=1 // pred_check_branch
      %21 = sbr.rel (0) target = $region9
    $region8: #{tpu_custom_call.1} parent=1 // pred_region
      _
    $region9: #{tpu_custom_call.1} parent=1 // pred_fallthru
      _
    // Predicated region
    $region10: #{tpu_custom_call.1} parent=1 // pred_check
      _
    $region11: #{tpu_custom_call.1} parent=1 // pred_check_branch
      %23 = sbr.rel (0) target = $region13
    $region12: #{tpu_custom_call.1} parent=1 // pred_region
      _
    $region13: #{tpu_custom_call.1} parent=1 // pred_fallthru
      _
    // Predicated region
    $region14: #{tpu_custom_call.1} parent=1 // pred_check
      _
    $region15: #{tpu_custom_call.1} parent=1 // pred_check_branch
      %25 = sbr.rel (0) target = $region17
    $region16: #{tpu_custom_call.1} parent=1 // pred_region
      _
    $region17: #{tpu_custom_call.1} parent=1 // pred_fallthru
      _
    // Predicated region
    $region18: #{tpu_custom_call.1} parent=1 // pred_check
      _
    $region19: #{tpu_custom_call.1} parent=1 // pred_check_branch
      %27 = sbr.rel (0) target = $region21
    $region20: #{tpu_custom_call.1} parent=1 // pred_region
      _
    $region21: #{tpu_custom_call.1} parent=1 // pred_fallthru
      _
    // Predicated region
    $region22: #{tpu_custom_call.1} parent=1 // pred_check
      _
    $region23: #{tpu_custom_call.1} parent=1 // pred_check_branch
      %29 = sbr.rel (0) target = $region25
    $region24: #{tpu_custom_call.1} parent=1 // pred_region
      _
    $region25: #{tpu_custom_call.1} parent=1 // pred_fallthru
      _
    // Predicated region
    $region26: #{tpu_custom_call.1} parent=1 // pred_check
      _
    $region27: #{tpu_custom_call.1} parent=1 // pred_check_branch
      %31 = sbr.rel (0) target = $region29
    $region28: #{tpu_custom_call.1} parent=1 // pred_region
      _
    $region29: #{tpu_custom_call.1} parent=1 // pred_fallthru
      _
    // Predicated region
    $region30: #{tpu_custom_call.1} parent=1 // pred_check
      _
    $region31: #{tpu_custom_call.1} parent=1 // pred_check_branch
      %33 = sbr.rel (0) target = $region33
    $region32: #{tpu_custom_call.1} parent=1 // pred_region
      _
    $region33: #{tpu_custom_call.1} parent=1 // pred_fallthru
      _
    // Predicated region
    $region34: #{tpu_custom_call.1} parent=1 // pred_check
      _
    $region35: #{tpu_custom_call.1} parent=1 // pred_check_branch
      %35 = sbr.rel (0) target = $region37
    $region36: #{tpu_custom_call.1} parent=1 // pred_region
      _
    $region37: #{tpu_custom_call.1} parent=1 // pred_fallthru
      _
    // Predicated region
    $region38: #{tpu_custom_call.1} parent=1 // pred_check
      _
    $region39: #{tpu_custom_call.1} parent=1 // pred_check_branch
      %37 = sbr.rel (0) target = $region41
    $region40: #{tpu_custom_call.1} parent=1 // pred_region
      _
    $region41: #{tpu_custom_call.1} parent=1 // pred_fallthru
      _
    // Predicated region
    $region42: #{tpu_custom_call.1} parent=1 // pred_check
      _
    $region43: #{tpu_custom_call.1} parent=1 // pred_check_branch
      %39 = sbr.rel (0) target = $region45
    $region44: #{tpu_custom_call.1} parent=1 // pred_region
      _
    $region45: #{tpu_custom_call.1} parent=1 // pred_fallthru
      _
    // Predicated region
    $region46: #{tpu_custom_call.1} parent=1 // pred_check
      _
    $region47: #{tpu_custom_call.1} parent=1 // pred_check_branch
      %41 = sbr.rel (0) target = $region49
    $region48: #{tpu_custom_call.1} parent=1 // pred_region
      _
    $region49: #{tpu_custom_call.1} parent=1 // pred_fallthru
      _
    %v42 = vld [vmem:[%s0] sm:$0xf]
    %v43 = vunpack.c.l.bf16 %v42
    %v44 = vld [vmem:[%s1] sm:$0xf]
    %v45 = vunpack.c.l.bf16 %v44
    %v46 = vld [vmem:[%s2] sm:$0xff]
    %v47 = vunpack.c.l.bf16 %v46
    %v48 = vunpack.c.h.bf16 %v46
    %v49 = vld [vmem:[%s3] sm:$0xff]
    %v50 = vunpack.c.l.bf16 %v49
    %v51 = vunpack.c.h.bf16 %v49
    %v52 = vld [vmem:[%s4] sm:$0xf]
    %v53 = vunpack.c.l.bf16 %v52
    %v54 = vld [vmem:[%s5] sm:$0xff]
    %v55 = vld [vmem:[%s5 + $0x8] sm:$0xff]
    %v56 = vld [vmem:[%s5 + $0x10] sm:$0xff]
    %v57 = vld [vmem:[%s5 + $0x18] sm:$0xff]
    %v58 = vld [vmem:[%s5 + $0x20] sm:$0xff]
    %v59 = vld [vmem:[%s5 + $0x28] sm:$0xff]
    %v60 = vld [vmem:[%s5 + $0x30] sm:$0xff]
    %v61 = vld [vmem:[%s5 + $0x38] sm:$0xff]
    %vm62 = vcmask 261120
    %v64 = vsel %vm62, %v45, 0
    %66 = vmatprep.subr.mxu0 %v55
    %67 = vmatpush1.msra.mxu0 %v54
    %68 = vmatprep.subr.mxu0 %v57
    %69 = vmatpush1.msra.mxu0 %v56
    %70 = vmatprep.subr.mxu0 %v59
    %71 = vmatpush1.msra.mxu0 %v58
    %72 = vmatprep.subr.mxu0 %v61
    %73 = vmatpush1.msra.mxu0 %v60
    %74 = vmatprep.subr.mxu0 0.0
    %75 = vmatpush1.msra.mxu0 0.0
    %76 = vmatprep.subr.mxu0 0.0
    %77 = vmatpush1.msra.mxu0 0.0
    %78 = vmatprep.subr.mxu0 0.0
    %79 = vmatpush1.msra.mxu0 0.0
    %80 = vmatprep.subr.mxu0 0.0
    %81 = vmatpush1.msra.mxu0 0.0
    %82 = vmatprep.subr.mxu0 0.0
    %83 = vmatpush1.msra.mxu0 0.0
    %84 = vmatprep.subr.mxu0 0.0
    %85 = vmatpush1.msra.mxu0 0.0
    %86 = vmatprep.subr.mxu0 0.0
    %87 = vmatpush1.msra.mxu0 0.0
    %88 = vmatprep.subr.mxu0 0.0
    %89 = vmatpush1.msra.mxu0 0.0
    %90 = vmatprep.subr.mxu0 0.0
    %91 = vmatpush1.msra.mxu0 0.0
    %92 = vmatprep.subr.mxu0 0.0
    %93 = vmatpush1.msra.mxu0 0.0
    %94 = vmatprep.subr.mxu0 0.0
    %95 = vmatpush1.msra.mxu0 0.0
    %96 = vmatprep.subr.mxu0 0.0
    %97 = vmatpush1.msra.mxu0 0.0
    %98 = vmatprep.subr.mxu0 0.0
    %99 = vmatpush1.msra.mxu0 0.0
    %100 = vmatprep.subr.mxu0 0.0
    %101 = vmatpush1.msra.mxu0 0.0
    %102 = vmatprep.subr.mxu0 0.0
    %103 = vmatpush1.msra.mxu0 0.0
    %104 = vmatprep.subr.mxu0 0.0
    %105 = vmatpush1.msra.mxu0 0.0
    %106 = vmatprep.subr.mxu0 0.0
    %107 = vmatpush1.msra.mxu0 0.0
    %108 = vmatprep.subr.mxu0 0.0
    %109 = vmatpush1.msra.mxu0 0.0
    %110 = vmatprep.subr.mxu0 0.0
    %111 = vmatpush1.msra.mxu0 0.0
    %112 = vmatprep.subr.mxu0 0.0
    %113 = vmatpush1.msra.mxu0 0.0
    %114 = vmatprep.subr.mxu0 0.0
    %115 = vmatpush1.msra.mxu0 0.0
    %116 = vmatprep.subr.mxu0 0.0
    %117 = vmatpush1.msra.mxu0 0.0
    %118 = vmatprep.subr.mxu0 0.0
    %119 = vmatpush1.msra.mxu0 0.0
    %120 = vmatprep.subr.mxu0 0.0
    %121 = vmatpush1.msra.mxu0 0.0
    %122 = vmatprep.subr.mxu0 0.0
    %123 = vmatpush1.msra.mxu0 0.0
    %124 = vmatprep.subr.mxu0 0.0
    %125 = vmatpush1.msra.mxu0 0.0
    %126 = vmatprep.subr.mxu0 0.0
    %127 = vmatpush1.msra.mxu0 0.0
    %128 = vmatprep.subr.mxu0 0.0
    %129 = vmatpush1.msra.mxu0 0.0
    %130 = vmatprep.mubr.f32.mxu0 0.0
    %131 = vmatmul.mubr.f32.gmra.mrb[0].mxu0 %v64
    %v132 = vpop.f32.mrb[0].mxu0
    %v133 = vadd.f32 0.0, %v132
    %v134 = vpop.f32.mrb[0].mxu0
    %v135 = vadd.f32 0.0, %v134
    %136 = vdwg.mxu0
    %v137 = vmul.f32 %v133, %v47
    %v138 = vmul.f32 %v135, %v48
    %v139 = vld [vmem:[%s6] sm:$0xff]
    %v140 = vld [vmem:[%s6 + $0x8] sm:$0xff]
    %v141 = vld [vmem:[%s6 + $0x10] sm:$0xff]
    %v142 = vld [vmem:[%s6 + $0x18] sm:$0xff]
    %v143 = vld [vmem:[%s6 + $0x20] sm:$0xff]
    %v144 = vld [vmem:[%s6 + $0x28] sm:$0xff]
    %v145 = vld [vmem:[%s6 + $0x30] sm:$0xff]
    %v146 = vld [vmem:[%s6 + $0x38] sm:$0xff]
    %v147 = vld [vmem:[%s6 + $0x40] sm:$0xff]
    %v148 = vld [vmem:[%s6 + $0x48] sm:$0xff]
    %v149 = vld [vmem:[%s6 + $0x50] sm:$0xff]
    %v150 = vld [vmem:[%s6 + $0x58] sm:$0xff]
    %v151 = vld [vmem:[%s6 + $0x60] sm:$0xff]
    %v152 = vld [vmem:[%s6 + $0x68] sm:$0xff]
    %v153 = vld [vmem:[%s6 + $0x70] sm:$0xff]
    %v154 = vld [vmem:[%s6 + $0x78] sm:$0xff]
    %v155 = vld [vmem:[%s6 + $0x80] sm:$0xff]
    %v156 = vld [vmem:[%s6 + $0x88] sm:$0xff]
    %v157 = vld [vmem:[%s6 + $0x90] sm:$0xff]
    %v158 = vld [vmem:[%s6 + $0x98] sm:$0xff]
    %v159 = vld [vmem:[%s6 + $0xa0] sm:$0xff]
    %v160 = vld [vmem:[%s6 + $0xa8] sm:$0xff]
    %v161 = vld [vmem:[%s6 + $0xb0] sm:$0xff]
    %v162 = vld [vmem:[%s6 + $0xb8] sm:$0xff]
    %v163 = vld [vmem:[%s6 + $0xc0] sm:$0xff]
    %v164 = vld [vmem:[%s6 + $0xc8] sm:$0xff]
    %v165 = vld [vmem:[%s6 + $0xd0] sm:$0xff]
    %v166 = vld [vmem:[%s6 + $0xd8] sm:$0xff]
    %v167 = vld [vmem:[%s6 + $0xe0] sm:$0xff]
    %v168 = vld [vmem:[%s6 + $0xe8] sm:$0xff]
    %v169 = vld [vmem:[%s6 + $0xf0] sm:$0xff]
    %v170 = vld [vmem:[%s6 + $0xf8] sm:$0xff]
    %171 = vmatprep.subr.mxu0 0.0
    %172 = vmatpush1.msra.mxu0 %v139
    %173 = vmatprep.subr.mxu0 0.0
    %174 = vmatpush1.msra.mxu0 %v140
    %175 = vmatprep.subr.mxu0 0.0
    %176 = vmatpush1.msra.mxu0 %v141
    %177 = vmatprep.subr.mxu0 0.0
    %178 = vmatpush1.msra.mxu0 %v142
    %179 = vmatprep.subr.mxu0 0.0
    %180 = vmatpush1.msra.mxu0 %v143
    %181 = vmatprep.subr.mxu0 0.0
    %182 = vmatpush1.msra.mxu0 %v144
    %183 = vmatprep.subr.mxu0 0.0
    %184 = vmatpush1.msra.mxu0 %v145
    %185 = vmatprep.subr.mxu0 0.0
    %186 = vmatpush1.msra.mxu0 %v146
    %187 = vmatprep.subr.mxu0 0.0
    %188 = vmatpush1.msra.mxu0 %v147
    %189 = vmatprep.subr.mxu0 0.0
    %190 = vmatpush1.msra.mxu0 %v148
    %191 = vmatprep.subr.mxu0 0.0
    %192 = vmatpush1.msra.mxu0 %v149
    %193 = vmatprep.subr.mxu0 0.0
    %194 = vmatpush1.msra.mxu0 %v150
    %195 = vmatprep.subr.mxu0 0.0
    %196 = vmatpush1.msra.mxu0 %v151
    %197 = vmatprep.subr.mxu0 0.0
    %198 = vmatpush1.msra.mxu0 %v152
    %199 = vmatprep.subr.mxu0 0.0
    %200 = vmatpush1.msra.mxu0 %v153
    %201 = vmatprep.subr.mxu0 0.0
    %202 = vmatpush1.msra.mxu0 %v154
    %203 = vmatprep.subr.mxu0 0.0
    %204 = vmatpush1.msra.mxu0 %v155
    %205 = vmatprep.subr.mxu0 0.0
    %206 = vmatpush1.msra.mxu0 %v156
    %207 = vmatprep.subr.mxu0 0.0
    %208 = vmatpush1.msra.mxu0 %v157
    %209 = vmatprep.subr.mxu0 0.0
    %210 = vmatpush1.msra.mxu0 %v158
    %211 = vmatprep.subr.mxu0 0.0
    %212 = vmatpush1.msra.mxu0 %v159
    %213 = vmatprep.subr.mxu0 0.0
    %214 = vmatpush1.msra.mxu0 %v160
    %215 = vmatprep.subr.mxu0 0.0
    %216 = vmatpush1.msra.mxu0 %v161
    %217 = vmatprep.subr.mxu0 0.0
    %218 = vmatpush1.msra.mxu0 %v162
    %219 = vmatprep.subr.mxu0 0.0
    %220 = vmatpush1.msra.mxu0 %v163
    %221 = vmatprep.subr.mxu0 0.0
    %222 = vmatpush1.msra.mxu0 %v164
    %223 = vmatprep.subr.mxu0 0.0
    %224 = vmatpush1.msra.mxu0 %v165
    %225 = vmatprep.subr.mxu0 0.0
    %226 = vmatpush1.msra.mxu0 %v166
    %227 = vmatprep.subr.mxu0 0.0
    %228 = vmatpush1.msra.mxu0 %v167
    %229 = vmatprep.subr.mxu0 0.0
    %230 = vmatpush1.msra.mxu0 %v168
    %231 = vmatprep.subr.mxu0 0.0
    %232 = vmatpush1.msra.mxu0 %v169
    %233 = vmatprep.subr.mxu0 0.0
    %234 = vmatpush1.msra.mxu0 %v170
    %235 = vmatprep.mubr.f32.mxu0 %v138
    %236 = vmatmul.mubr.f32.gmra.mrb[0].mxu0 %v137
    %v237 = vpop.f32.mrb[0].mxu0
    %v238 = vadd.f32 %v53, %v237
    %v239 = vpop.f32.mrb[0].mxu0
    %240 = vdwg.mxu0
    %vm241 = vcmask 64512
    %v242 = vsel %vm241, %v238, -inf
    %243 = vmax.xlane.f32.xlu0 %v242
    %v244 = vpop.xlane.xlu0 %243
    %v245 = vsub.f32 %v238, %v244
    %v246 = vmul.f32 %v245, 1.442695
    %v247 = vpow.pop %v246
    %v248 = vsel %vm241, %v247, 0.0
    %249 = vadd.xlane.f32.xlu0 %v248
    %v250 = vpop.xlane.xlu0 %249
    %v251 = vrcp.pop %v250
    %v252 = vmul.f32 %v247, %v251
    %v253 = vld [vmem:[%s7] sm:$0xff]
    %v254 = vld [vmem:[%s7 + $0x8] sm:$0xff]
    %v256 = vsel %vm241, %v252, 0
    %258 = vmatprep.subr.mxu0 %v254
    %259 = vmatpush1.msra.mxu0 %v253
    %260 = vmatprep.subr.mxu0 0.0
    %261 = vmatpush1.msra.mxu0 0.0
    %262 = vmatprep.subr.mxu0 0.0
    %263 = vmatpush1.msra.mxu0 0.0
    %264 = vmatprep.subr.mxu0 0.0
    %265 = vmatpush1.msra.mxu0 0.0
    %266 = vmatprep.subr.mxu0 0.0
    %267 = vmatpush1.msra.mxu0 0.0
    %268 = vmatprep.subr.mxu0 0.0
    %269 = vmatpush1.msra.mxu0 0.0
    %270 = vmatprep.subr.mxu0 0.0
    %271 = vmatpush1.msra.mxu0 0.0
    %272 = vmatprep.subr.mxu0 0.0
    %273 = vmatpush1.msra.mxu0 0.0
    %274 = vmatprep.subr.mxu0 0.0
    %275 = vmatpush1.msra.mxu0 0.0
    %276 = vmatprep.subr.mxu0 0.0
    %277 = vmatpush1.msra.mxu0 0.0
    %278 = vmatprep.subr.mxu0 0.0
    %279 = vmatpush1.msra.mxu0 0.0
    %280 = vmatprep.subr.mxu0 0.0
    %281 = vmatpush1.msra.mxu0 0.0
    %282 = vmatprep.subr.mxu0 0.0
    %283 = vmatpush1.msra.mxu0 0.0
    %284 = vmatprep.subr.mxu0 0.0
    %285 = vmatpush1.msra.mxu0 0.0
    %286 = vmatprep.subr.mxu0 0.0
    %287 = vmatpush1.msra.mxu0 0.0
    %288 = vmatprep.subr.mxu0 0.0
    %289 = vmatpush1.msra.mxu0 0.0
    %290 = vmatprep.subr.mxu0 0.0
    %291 = vmatpush1.msra.mxu0 0.0
    %292 = vmatprep.subr.mxu0 0.0
    %293 = vmatpush1.msra.mxu0 0.0
    %294 = vmatprep.subr.mxu0 0.0
    %295 = vmatpush1.msra.mxu0 0.0
    %296 = vmatprep.subr.mxu0 0.0
    %297 = vmatpush1.msra.mxu0 0.0
    %298 = vmatprep.subr.mxu0 0.0
    %299 = vmatpush1.msra.mxu0 0.0
    %300 = vmatprep.subr.mxu0 0.0
    %301 = vmatpush1.msra.mxu0 0.0
    %302 = vmatprep.subr.mxu0 0.0
    %303 = vmatpush1.msra.mxu0 0.0
    %304 = vmatprep.subr.mxu0 0.0
    %305 = vmatpush1.msra.mxu0 0.0
    %306 = vmatprep.subr.mxu0 0.0
    %307 = vmatpush1.msra.mxu0 0.0
    %308 = vmatprep.subr.mxu0 0.0
    %309 = vmatpush1.msra.mxu0 0.0
    %310 = vmatprep.subr.mxu0 0.0
    %311 = vmatpush1.msra.mxu0 0.0
    %312 = vmatprep.subr.mxu0 0.0
    %313 = vmatpush1.msra.mxu0 0.0
    %314 = vmatprep.subr.mxu0 0.0
    %315 = vmatpush1.msra.mxu0 0.0
    %316 = vmatprep.subr.mxu0 0.0
    %317 = vmatpush1.msra.mxu0 0.0
    %318 = vmatprep.subr.mxu0 0.0
    %319 = vmatpush1.msra.mxu0 0.0
    %320 = vmatprep.subr.mxu0 0.0
    %321 = vmatpush1.msra.mxu0 0.0
    %322 = vmatprep.mubr.f32.mxu0 0.0
    %323 = vmatmul.mubr.f32.gmra.mrb[0].mxu0 %v256
    %v324 = vpop.f32.mrb[0].mxu0
    %v325 = vadd.f32 0.0, %v324
    %v326 = vpop.f32.mrb[0].mxu0
    %v327 = vadd.f32 0.0, %v326
    %328 = vdwg.mxu0
    %v329 = vmul.f32 %v325, %v50
    %v330 = vmul.f32 %v327, %v51
    %v331 = vld [vmem:[%s8] sm:$0xff]
    %v332 = vld [vmem:[%s8 + $0x8] sm:$0xff]
    %v333 = vld [vmem:[%s8 + $0x10] sm:$0xff]
    %v334 = vld [vmem:[%s8 + $0x18] sm:$0xff]
    %v335 = vld [vmem:[%s8 + $0x20] sm:$0xff]
    %v336 = vld [vmem:[%s8 + $0x28] sm:$0xff]
    %v337 = vld [vmem:[%s8 + $0x30] sm:$0xff]
    %v338 = vld [vmem:[%s8 + $0x38] sm:$0xff]
    %v339 = vld [vmem:[%s8 + $0x40] sm:$0xff]
    %v340 = vld [vmem:[%s8 + $0x48] sm:$0xff]
    %v341 = vld [vmem:[%s8 + $0x50] sm:$0xff]
    %v342 = vld [vmem:[%s8 + $0x58] sm:$0xff]
    %v343 = vld [vmem:[%s8 + $0x60] sm:$0xff]
    %v344 = vld [vmem:[%s8 + $0x68] sm:$0xff]
    %v345 = vld [vmem:[%s8 + $0x70] sm:$0xff]
    %v346 = vld [vmem:[%s8 + $0x78] sm:$0xff]
    %v347 = vld [vmem:[%s8 + $0x80] sm:$0xff]
    %v348 = vld [vmem:[%s8 + $0x88] sm:$0xff]
    %v349 = vld [vmem:[%s8 + $0x90] sm:$0xff]
    %v350 = vld [vmem:[%s8 + $0x98] sm:$0xff]
    %v351 = vld [vmem:[%s8 + $0xa0] sm:$0xff]
    %v352 = vld [vmem:[%s8 + $0xa8] sm:$0xff]
    %v353 = vld [vmem:[%s8 + $0xb0] sm:$0xff]
    %v354 = vld [vmem:[%s8 + $0xb8] sm:$0xff]
    %v355 = vld [vmem:[%s8 + $0xc0] sm:$0xff]
    %v356 = vld [vmem:[%s8 + $0xc8] sm:$0xff]
    %v357 = vld [vmem:[%s8 + $0xd0] sm:$0xff]
    %v358 = vld [vmem:[%s8 + $0xd8] sm:$0xff]
    %v359 = vld [vmem:[%s8 + $0xe0] sm:$0xff]
    %v360 = vld [vmem:[%s8 + $0xe8] sm:$0xff]
    %v361 = vld [vmem:[%s8 + $0xf0] sm:$0xff]
    %v362 = vld [vmem:[%s8 + $0xf8] sm:$0xff]
    %v363 = vld [vmem:[%s9] sm:$0xff]
    %v364 = vld [vmem:[%s9 + $0x8] sm:$0xff]
    %v365 = vld [vmem:[%s9 + $0x10] sm:$0xff]
    %v366 = vld [vmem:[%s9 + $0x18] sm:$0xff]
    %v368 = vsel %vm62, %v43, 0
    %370 = vmatprep.subr.mxu0 0.0
    %371 = vmatpush1.msra.mxu0 %v363
    %372 = vmatprep.subr.mxu0 0.0
    %373 = vmatpush1.msra.mxu0 %v364
    %374 = vmatprep.subr.mxu0 0.0
    %375 = vmatpush1.msra.mxu0 %v365
    %376 = vmatprep.subr.mxu0 0.0
    %377 = vmatpush1.msra.mxu0 %v366
    %378 = vmatprep.subr.mxu0 0.0
    %379 = vmatpush1.msra.mxu0 0.0
    %380 = vmatprep.subr.mxu0 0.0
    %381 = vmatpush1.msra.mxu0 0.0
    %382 = vmatprep.subr.mxu0 0.0
    %383 = vmatpush1.msra.mxu0 0.0
    %384 = vmatprep.subr.mxu0 0.0
    %385 = vmatpush1.msra.mxu0 0.0
    %386 = vmatprep.subr.mxu0 0.0
    %387 = vmatpush1.msra.mxu0 0.0
    %388 = vmatprep.subr.mxu0 0.0
    %389 = vmatpush1.msra.mxu0 0.0
    %390 = vmatprep.subr.mxu0 0.0
    %391 = vmatpush1.msra.mxu0 0.0
    %392 = vmatprep.subr.mxu0 0.0
    %393 = vmatpush1.msra.mxu0 0.0
    %394 = vmatprep.subr.mxu0 0.0
    %395 = vmatpush1.msra.mxu0 0.0
    %396 = vmatprep.subr.mxu0 0.0
    %397 = vmatpush1.msra.mxu0 0.0
    %398 = vmatprep.subr.mxu0 0.0
    %399 = vmatpush1.msra.mxu0 0.0
    %400 = vmatprep.subr.mxu0 0.0
    %401 = vmatpush1.msra.mxu0 0.0
    %402 = vmatprep.subr.mxu0 0.0
    %403 = vmatpush1.msra.mxu0 0.0
    %404 = vmatprep.subr.mxu0 0.0
    %405 = vmatpush1.msra.mxu0 0.0
    %406 = vmatprep.subr.mxu0 0.0
    %407 = vmatpush1.msra.mxu0 0.0
    %408 = vmatprep.subr.mxu0 0.0
    %409 = vmatpush1.msra.mxu0 0.0
    %410 = vmatprep.subr.mxu0 0.0
    %411 = vmatpush1.msra.mxu0 0.0
    %412 = vmatprep.subr.mxu0 0.0
    %413 = vmatpush1.msra.mxu0 0.0
    %414 = vmatprep.subr.mxu0 0.0
    %415 = vmatpush1.msra.mxu0 0.0
    %416 = vmatprep.subr.mxu0 0.0
    %417 = vmatpush1.msra.mxu0 0.0
    %418 = vmatprep.subr.mxu0 0.0
    %419 = vmatpush1.msra.mxu0 0.0
    %420 = vmatprep.subr.mxu0 0.0
    %421 = vmatpush1.msra.mxu0 0.0
    %422 = vmatprep.subr.mxu0 0.0
    %423 = vmatpush1.msra.mxu0 0.0
    %424 = vmatprep.subr.mxu0 0.0
    %425 = vmatpush1.msra.mxu0 0.0
    %426 = vmatprep.subr.mxu0 0.0
    %427 = vmatpush1.msra.mxu0 0.0
    %428 = vmatprep.subr.mxu0 0.0
    %429 = vmatpush1.msra.mxu0 0.0
    %430 = vmatprep.subr.mxu0 0.0
    %431 = vmatpush1.msra.mxu0 0.0
    %432 = vmatprep.subr.mxu0 0.0
    %433 = vmatpush1.msra.mxu0 0.0
    %434 = vmatprep.mubr.f32.mxu0 0.0
    %435 = vmatmul.mubr.f32.gmra.mrb[0].mxu0 %v368
    %v436 = vpop.f32.mrb[0].mxu0
    %v437 = vadd.f32 0.0, %v436
    %v438 = vpop.f32.mrb[0].mxu0
    %439 = vdwg.mxu0
    %440 = vmatprep.subr.mxu0 0.0
    %441 = vmatpush1.msra.mxu0 %v331
    %442 = vmatprep.subr.mxu0 0.0
    %443 = vmatpush1.msra.mxu0 %v332
    %444 = vmatprep.subr.mxu0 0.0
    %445 = vmatpush1.msra.mxu0 %v333
    %446 = vmatprep.subr.mxu0 0.0
    %447 = vmatpush1.msra.mxu0 %v334
    %448 = vmatprep.subr.mxu0 0.0
    %449 = vmatpush1.msra.mxu0 %v335
    %450 = vmatprep.subr.mxu0 0.0
    %451 = vmatpush1.msra.mxu0 %v336
    %452 = vmatprep.subr.mxu0 0.0
    %453 = vmatpush1.msra.mxu0 %v337
    %454 = vmatprep.subr.mxu0 0.0
    %455 = vmatpush1.msra.mxu0 %v338
    %456 = vmatprep.subr.mxu0 0.0
    %457 = vmatpush1.msra.mxu0 %v339
    %458 = vmatprep.subr.mxu0 0.0
    %459 = vmatpush1.msra.mxu0 %v340
    %460 = vmatprep.subr.mxu0 0.0
    %461 = vmatpush1.msra.mxu0 %v341
    %462 = vmatprep.subr.mxu0 0.0
    %463 = vmatpush1.msra.mxu0 %v342
    %464 = vmatprep.subr.mxu0 0.0
    %465 = vmatpush1.msra.mxu0 %v343
    %466 = vmatprep.subr.mxu0 0.0
    %467 = vmatpush1.msra.mxu0 %v344
    %468 = vmatprep.subr.mxu0 0.0
    %469 = vmatpush1.msra.mxu0 %v345
    %470 = vmatprep.subr.mxu0 0.0
    %471 = vmatpush1.msra.mxu0 %v346
    %472 = vmatprep.subr.mxu0 0.0
    %473 = vmatpush1.msra.mxu0 %v347
    %474 = vmatprep.subr.mxu0 0.0
    %475 = vmatpush1.msra.mxu0 %v348
    %476 = vmatprep.subr.mxu0 0.0
    %477 = vmatpush1.msra.mxu0 %v349
    %478 = vmatprep.subr.mxu0 0.0
    %479 = vmatpush1.msra.mxu0 %v350
    %480 = vmatprep.subr.mxu0 0.0
    %481 = vmatpush1.msra.mxu0 %v351
    %482 = vmatprep.subr.mxu0 0.0
    %483 = vmatpush1.msra.mxu0 %v352
    %484 = vmatprep.subr.mxu0 0.0
    %485 = vmatpush1.msra.mxu0 %v353
    %486 = vmatprep.subr.mxu0 0.0
    %487 = vmatpush1.msra.mxu0 %v354
    %488 = vmatprep.subr.mxu0 0.0
    %489 = vmatpush1.msra.mxu0 %v355
    %490 = vmatprep.subr.mxu0 0.0
    %491 = vmatpush1.msra.mxu0 %v356
    %492 = vmatprep.subr.mxu0 0.0
    %493 = vmatpush1.msra.mxu0 %v357
    %494 = vmatprep.subr.mxu0 0.0
    %495 = vmatpush1.msra.mxu0 %v358
    %496 = vmatprep.subr.mxu0 0.0
    %497 = vmatpush1.msra.mxu0 %v359
    %498 = vmatprep.subr.mxu0 0.0
    %499 = vmatpush1.msra.mxu0 %v360
    %500 = vmatprep.subr.mxu0 0.0
    %501 = vmatpush1.msra.mxu0 %v361
    %502 = vmatprep.subr.mxu0 0.0
    %503 = vmatpush1.msra.mxu0 %v362
    %504 = vmatprep.mubr.f32.mxu0 %v330
    %505 = vmatmul.mubr.f32.gmra.mrb[0].mxu0 %v329
    %v506 = vpop.f32.mrb[0].mxu0
    %v507 = vadd.f32 %v437, %v506
    %v508 = vpop.f32.mrb[0].mxu0
    %509 = vdwg.mxu0
    %v510 = vmax.f32 %v507, 0.0
    %v511 = vadd.f32 %v510, %v43
    %v512 = vsel %vm62, %v511, 0.0
    %513 = vadd.xlane.f32.xlu0 %v512
    %v514 = vpop.xlane.xlu0 %513
    %v515 = vrcp.pop 32.0
    %v516 = vmul.f32 %v514, %v515
    %v517 = vsub.f32 %v511, %v516
    %v518 = vmul.f32 %v517, %v517
    %v519 = vsel %vm62, %v518, 0.0
    %520 = vadd.xlane.f32.xlu0 %v519
    %v521 = vpop.xlane.xlu0 %520
    %v522 = vmul.f32 %v521, %v515
    %v523 = vadd.f32 %v522, 1e-05
    %v524 = vrsqrt.pop %v523
    %v525 = vmul.f32 %v517, %v524
    %v526 = vld [vmem:[%s10] sm:$0x1]
    %v528 = vlaneseq
    %v529 = vshrl.u32 %v528, 7
    %v530 = vsub.s32 0, %v529
    %v531 = vrot.slane %v526, %v530
    %v533 = vmul.f32 %v525, %v531
    %v534 = vld [vmem:[%s11] sm:$0x1]
    %v536 = vlaneseq
    %v537 = vshrl.u32 %v536, 7
    %v538 = vsub.s32 0, %v537
    %v539 = vrot.slane %v534, %v538
    %v541 = vadd.f32 %v533, %v539
    %542 = vst.msk [vmem:[#allocation2] sm:$0xff] %vm62, %v541
    // Predicated region
    $region50: #{tpu_custom_call.1} parent=1 // pred_check
      _
    $region51: #{tpu_custom_call.1} parent=1 // pred_check_branch
      %544 = sbr.rel (0) target = $region53
    $region52: #{tpu_custom_call.1} parent=1 // pred_region
      %s546 = ssub.s32 128, 128
      %547 = vsyncadd [#allocation3], %s546
      %s549 = sshll.u32 [#allocation2], 4
      %s550 = int_to_ptr.vmem [resolvable:$true] %s549
      %552 = dma.vmem_to_hbm [thread:$0]  %s550, 128, %s12, [#allocation3]
    $region53: #{tpu_custom_call.1} parent=1 // pred_fallthru
      _
    // Predicated region
    $region54: #{tpu_custom_call.1} parent=1 // pred_check
      _
    $region55: #{tpu_custom_call.1} parent=1 // pred_check_branch
      %554 = sbr.rel (0) target = $region57
    $region56: #{tpu_custom_call.1} parent=1 // pred_region
      %555 = dma.done [#allocation3], 128
    $region57: #{tpu_custom_call.1} parent=1 // pred_fallthru
      _
    %556 = vsyncpa [#allocation3], 1

</llo_original>
